<compile_context>
chip_gen: v5e
topology: v5e:2x2
jax: 0.10.0
libtpu: 0.0.40
codegen_flags: <defaults>
</compile_context>

<pallas_src>
import jax
import jax.numpy as jnp
from jax.experimental import pallas as pl
from jax.experimental.pallas import tpu as pltpu

_HIDDEN = 256
_LANE = 128
_SUBLANE = 8
_MAX_TB = 512          # batch rows per grid step (sized for v7x's 64 MiB VMEM)
_VMEM_LIMIT = 64 * 1024 * 1024


def _round_up(n, m):
    return ((n + m - 1) // m) * m


def _pad2(a, rows, cols):
    pr, pc = rows - a.shape[0], cols - a.shape[1]
    if pr or pc:
        a = jnp.pad(a, ((0, pr), (0, pc)))
    return a


# ----------------------------- Pallas kernels ------------------------------


def _fused_kernel_with_y(alpha_ref,            # SMEM (2,)  softmax(alpha), f32
                         x_ref, y_ref,         # (TB, Dp) bf16
                         wm_ref, bm_ref,       # (Dp, 256) bf16, (1, 256) f32   fc_multi
                         wd_ref, bd_ref,       # (Dp, 256) bf16, (1, 256) f32   fc_depth
                         wfc_ref, bfc_ref,     # (256, Cp) bf16, (1, Cp) f32    fc
                         x1_ref, fusion_ref, out_ref):
    # bf16 MXU inputs, f32 accumulation.
    x1 = jnp.dot(x_ref[...], wm_ref[...],
                 preferred_element_type=jnp.float32) + bm_ref[...]
    y1 = jnp.dot(y_ref[...], wd_ref[...],
                 preferred_element_type=jnp.float32) + bd_ref[...]
    a0 = alpha_ref[0]
    a1 = alpha_ref[1]
    fusion = a0 * x1 + a1 * y1                         # f32 elementwise
    out = jnp.dot(fusion.astype(jnp.bfloat16), wfc_ref[...],
                  preferred_element_type=jnp.float32) + bfc_ref[...]
    x1_ref[...] = x1.astype(x1_ref.dtype)
    fusion_ref[...] = fusion.astype(fusion_ref.dtype)
    out_ref[...] = out.astype(out_ref.dtype)


def _fused_kernel_no_y(x_ref,                  # (TB, Dp) bf16
                       wu_ref, bu_ref,         # (Dp, 256) bf16, (1, 256) f32   fc_uni
                       wa_ref, ba_ref,         # (256, 256) bf16, (1, 256) f32  fc_add
                       wfc_ref, bfc_ref,       # (256, Cp) bf16, (1, Cp) f32    fc
                       x1_ref, fusion_ref, out_ref):
    x1 = jnp.dot(x_ref[...], wu_ref[...],
                 preferred_element_type=jnp.float32) + bu_ref[...]
    x2 = jnp.maximum(x1, 0.0)                          # ReLU in f32
    fusion = jnp.dot(x2.astype(jnp.bfloat16), wa_ref[...],
                     preferred_element_type=jnp.float32) + ba_ref[...]
    out = jnp.dot(fusion.astype(jnp.bfloat16), wfc_ref[...],
                  preferred_element_type=jnp.float32) + bfc_ref[...]
    x1_ref[...] = x1.astype(x1_ref.dtype)
    fusion_ref[...] = fusion.astype(fusion_ref.dtype)
    out_ref[...] = out.astype(out_ref.dtype)


# ------------------------------ JAX wrapper ---------------------------------


@jax.jit
def feat_classifier_forward(params, x, y=None):
    """Mirrors feat_classifier.forward; returns (x1, fusion, out), all f32."""
    B, D = x.shape
    H = params["w_multi"].shape[1]                 # 256
    C = params["w_fc"].shape[1]                    # num_class

    D_pad = _round_up(D, _LANE)
    C_pad = _round_up(C, _LANE)                    # lane-dense final output
    TB = min(_MAX_TB, _round_up(B, _SUBLANE))
    B_pad = _round_up(B, TB)
    nb = B_pad // TB

    bf16 = jnp.bfloat16
    x_p = _pad2(x, B_pad, D_pad).astype(bf16)
    wfc = _pad2(params["w_fc"], H, C_pad).astype(bf16)
    bfc = _pad2(params["b_fc"], 1, C_pad).astype(jnp.float32)

    out_shapes = (
        jax.ShapeDtypeStruct((B_pad, H), jnp.float32),       # x1
        jax.ShapeDtypeStruct((B_pad, H), jnp.float32),       # fusion
        jax.ShapeDtypeStruct((B_pad, C_pad), jnp.float32),   # out (padded lanes)
    )
    out_specs = (
        pl.BlockSpec((TB, H), lambda i: (i, 0)),
        pl.BlockSpec((TB, H), lambda i: (i, 0)),
        pl.BlockSpec((TB, C_pad), lambda i: (i, 0)),
    )
    compiler_params = pltpu.CompilerParams(
        dimension_semantics=("parallel",),         # v7x: shard batch over 2 TCs
        vmem_limit_bytes=_VMEM_LIMIT,
    )

    if y is not None:
        alpha_soft = jax.nn.softmax(params["alpha"]).astype(jnp.float32)  # (2,)
        y_p = _pad2(y, B_pad, D_pad).astype(bf16)
        wm = _pad2(params["w_multi"], D_pad, H).astype(bf16)
        wd = _pad2(params["w_depth"], D_pad, H).astype(bf16)
        bm = params["b_multi"].astype(jnp.float32)
        bd = params["b_depth"].astype(jnp.float32)

        x1, fusion, out = pl.pallas_call(
            _fused_kernel_with_y,
            out_shape=out_shapes,
            grid=(nb,),
            in_specs=[
                # softmax(alpha) scalars live in SMEM, shared across all steps.
                pl.BlockSpec(memory_space=pltpu.MemorySpace.SMEM),
                pl.BlockSpec((TB, D_pad), lambda i: (i, 0)),   # x tile
                pl.BlockSpec((TB, D_pad), lambda i: (i, 0)),   # y tile
                pl.BlockSpec((D_pad, H), lambda i: (0, 0)),    # fc_multi W (resident)
                pl.BlockSpec((1, H), lambda i: (0, 0)),        # fc_multi b
                pl.BlockSpec((D_pad, H), lambda i: (0, 0)),    # fc_depth W (resident)
                pl.BlockSpec((1, H), lambda i: (0, 0)),        # fc_depth b
                pl.BlockSpec((H, C_pad), lambda i: (0, 0)),    # fc W (resident)
                pl.BlockSpec((1, C_pad), lambda i: (0, 0)),    # fc b
            ],
            out_specs=out_specs,
            compiler_params=compiler_params,
        )(alpha_soft, x_p, y_p, wm, bm, wd, bd, wfc, bfc)
    else:
        wu = _pad2(params["w_uni"], D_pad, H).astype(bf16)
        bu = params["b_uni"].astype(jnp.float32)
        wa = params["w_add"].astype(bf16)
        ba = params["b_add"].astype(jnp.float32)

        x1, fusion, out = pl.pallas_call(
            _fused_kernel_no_y,
            out_shape=out_shapes,
            grid=(nb,),
            in_specs=[
                pl.BlockSpec((TB, D_pad), lambda i: (i, 0)),   # x tile
                pl.BlockSpec((D_pad, H), lambda i: (0, 0)),    # fc_uni W (resident)
                pl.BlockSpec((1, H), lambda i: (0, 0)),        # fc_uni b
                pl.BlockSpec((H, H), lambda i: (0, 0)),        # fc_add W (resident)
                pl.BlockSpec((1, H), lambda i: (0, 0)),        # fc_add b
                pl.BlockSpec((H, C_pad), lambda i: (0, 0)),    # fc W (resident)
                pl.BlockSpec((1, C_pad), lambda i: (0, 0)),    # fc b
            ],
            out_specs=out_specs,
            compiler_params=compiler_params,
        )(x_p, wu, bu, wa, ba, wfc, bfc)

    # Strip batch padding and the lane padding of the final logits.
    return x1[:B], fusion[:B], out[:B, :C]


# -------------------------- deterministic params ----------------------------


def _xavier_normal(key, fan_in, fan_out):
    # nn.init.xavier_normal_: std = sqrt(2 / (fan_in + fan_out)); stored (in, out).
    std = (2.0 / (fan_in + fan_out)) ** 0.5
    return std * jax.random.normal(key, (fan_in, fan_out), dtype=jnp.float32)


def init_params(key, bottleneck_dim, num_class, hidden=_HIDDEN):
    ks = jax.random.split(key, 6)
    params = {
        "alpha":  jnp.ones((2,), jnp.float32),               # nn.Parameter(ones(2))
        "w_multi": _xavier_normal(ks[0], bottleneck_dim, hidden),
        "b_multi": jnp.zeros((1, hidden), jnp.float32),
        "w_depth": _xavier_normal(ks[1], bottleneck_dim, hidden),
        "b_depth": jnp.zeros((1, hidden), jnp.float32),
        "w_uni":   _xavier_normal(ks[2], bottleneck_dim, hidden),
        "b_uni":   jnp.zeros((1, hidden), jnp.float32),
        "w_add":   _xavier_normal(ks[3], hidden, hidden),
        "b_add":   jnp.zeros((1, hidden), jnp.float32),
        "w_fc":    _xavier_normal(ks[4], hidden, num_class),
        "b_fc":    jnp.zeros((1, num_class), jnp.float32),
        # fc1 exists in __init__ but is unused in forward.
    }
    # TODO(synk): type='wn' (weight_norm on fc) not implemented; default 'linear' path only.
    return params


# --------------------------------- main --------------------------------------


if __name__ == "__main__":
    key = jax.random.PRNGKey(0)
    B, D, C = 8, 512, 16          # small bottleneck_dim stand-in for 2048

    kp, kx, ky = jax.random.split(key, 3)
    params = init_params(kp, bottleneck_dim=D, num_class=C)
    x = jax.random.normal(kx, (B, D), dtype=jnp.float32)
    y = jax.random.normal(ky, (B, D), dtype=jnp.float32)

    # Branch with y (multi-modal fusion path).
    x1_a, fusion_a, out_a = feat_classifier_forward(params, x, y)
    # Branch without y (uni-modal path).
    x1_b, fusion_b, out_b = feat_classifier_forward(params, x, None)

    jax.block_until_ready((x1_a, fusion_a, out_a, x1_b, fusion_b, out_b))

    # Pure-JAX f32 reference (correctness gate; bf16 MXU inputs -> relaxed tol).
    TOL = dict(atol=5e-2, rtol=5e-2)
    a_soft = jax.nn.softmax(params["alpha"])
    rx1 = x @ params["w_multi"] + params["b_multi"]
    ry1 = y @ params["w_depth"] + params["b_depth"]
    rfus = a_soft[0] * rx1 + a_soft[1] * ry1
    rout = rfus @ params["w_fc"] + params["b_fc"]
    assert jnp.allclose(x1_a, rx1, **TOL)
    assert jnp.allclose(fusion_a, rfus, **TOL)
    assert jnp.allclose(out_a, rout, **TOL)

    rx1b = x @ params["w_uni"] + params["b_uni"]
    rfusb = jnp.maximum(rx1b, 0.0) @ params["w_add"] + params["b_add"]
    routb = rfusb @ params["w_fc"] + params["b_fc"]
    assert jnp.allclose(x1_b, rx1b, **TOL)
    assert jnp.allclose(fusion_b, rfusb, **TOL)
    assert jnp.allclose(out_b, routb, **TOL)

    print("KERNEL_OK")
</pallas_src>

<mosaic_0001>
module attributes {stable_mosaic.version = 11 : i64} {
  func.func @_fused_kernel_with_y(%arg0: i32, %arg1: memref<2xf32, #tpu.memory_space<smem>>, %arg2: memref<8x512xbf16, #tpu.memory_space<vmem>>, %arg3: memref<8x512xbf16, #tpu.memory_space<vmem>>, %arg4: memref<512x256xbf16, #tpu.memory_space<vmem>>, %arg5: memref<1x256xf32, #tpu.memory_space<vmem>>, %arg6: memref<512x256xbf16, #tpu.memory_space<vmem>>, %arg7: memref<1x256xf32, #tpu.memory_space<vmem>>, %arg8: memref<256x128xbf16, #tpu.memory_space<vmem>>, %arg9: memref<1x128xf32, #tpu.memory_space<vmem>>, %arg10: memref<8x256xf32, #tpu.memory_space<vmem>>, %arg11: memref<8x256xf32, #tpu.memory_space<vmem>>, %arg12: memref<8x128xf32, #tpu.memory_space<vmem>>) attributes {dimension_semantics = [#tpu.dimension_semantics<parallel>], iteration_bounds = array<i64: 1>, scalar_prefetch = 0 : i64, scratch_operands = 0 : i64, tpu.core_type = #tpu.core_type<tc>, window_params = [{transform_indices = @transform_0, window_bounds = array<i64: 2>}, {transform_indices = @transform_1, window_bounds = array<i64: 8, 512>}, {transform_indices = @transform_2, window_bounds = array<i64: 8, 512>}, {pipeline_mode = #tpu.pipeline_mode<synchronous>, transform_indices = @transform_3, window_bounds = array<i64: 512, 256>}, {pipeline_mode = #tpu.pipeline_mode<synchronous>, transform_indices = @transform_4, window_bounds = array<i64: 1, 256>}, {pipeline_mode = #tpu.pipeline_mode<synchronous>, transform_indices = @transform_5, window_bounds = array<i64: 512, 256>}, {pipeline_mode = #tpu.pipeline_mode<synchronous>, transform_indices = @transform_6, window_bounds = array<i64: 1, 256>}, {pipeline_mode = #tpu.pipeline_mode<synchronous>, transform_indices = @transform_7, window_bounds = array<i64: 256, 128>}, {pipeline_mode = #tpu.pipeline_mode<synchronous>, transform_indices = @transform_8, window_bounds = array<i64: 1, 128>}, {transform_indices = @transform_9, window_bounds = array<i64: 8, 256>}, {transform_indices = @transform_10, window_bounds = array<i64: 8, 256>}, {transform_indices = @transform_11, window_bounds = array<i64: 8, 128>}]} {
    %c0 = arith.constant 0 : index
    %c0_0 = arith.constant 0 : index
    %0 = vector.load %arg2[%c0, %c0_0] : memref<8x512xbf16, #tpu.memory_space<vmem>>, vector<8x512xbf16>
    %c0_1 = arith.constant 0 : index
    %c0_2 = arith.constant 0 : index
    %1 = vector.load %arg4[%c0_1, %c0_2] : memref<512x256xbf16, #tpu.memory_space<vmem>>, vector<512x256xbf16>
    %cst = arith.constant dense<0.000000e+00> : vector<8x256xf32>
    %2 = tpu.matmul %0, %1, %cst {dimension_numbers = #tpu.dot_dimension_numbers<[1], [0], [0], [1], [0, 0, 1, 1], [], []>} : vector<8x512xbf16>, vector<512x256xbf16>, vector<8x256xf32> -> vector<8x256xf32>
    %c0_3 = arith.constant 0 : index
    %c0_4 = arith.constant 0 : index
    %3 = vector.load %arg5[%c0_3, %c0_4] : memref<1x256xf32, #tpu.memory_space<vmem>>, vector<1x256xf32>
    %4 = vector.broadcast %3 : vector<1x256xf32> to vector<8x256xf32>
    %5 = arith.addf %2, %4 : vector<8x256xf32>
    %c0_5 = arith.constant 0 : index
    %c0_6 = arith.constant 0 : index
    %6 = vector.load %arg3[%c0_5, %c0_6] : memref<8x512xbf16, #tpu.memory_space<vmem>>, vector<8x512xbf16>
    %c0_7 = arith.constant 0 : index
    %c0_8 = arith.constant 0 : index
    %7 = vector.load %arg6[%c0_7, %c0_8] : memref<512x256xbf16, #tpu.memory_space<vmem>>, vector<512x256xbf16>
    %cst_9 = arith.constant dense<0.000000e+00> : vector<8x256xf32>
    %8 = tpu.matmul %6, %7, %cst_9 {dimension_numbers = #tpu.dot_dimension_numbers<[1], [0], [0], [1], [0, 0, 1, 1], [], []>} : vector<8x512xbf16>, vector<512x256xbf16>, vector<8x256xf32> -> vector<8x256xf32>
    %c0_10 = arith.constant 0 : index
    %c0_11 = arith.constant 0 : index
    %9 = vector.load %arg7[%c0_10, %c0_11] : memref<1x256xf32, #tpu.memory_space<vmem>>, vector<1x256xf32>
    %10 = vector.broadcast %9 : vector<1x256xf32> to vector<8x256xf32>
    %11 = arith.addf %8, %10 : vector<8x256xf32>
    %c0_12 = arith.constant 0 : index
    %12 = memref.load %arg1[%c0_12] : memref<2xf32, #tpu.memory_space<smem>>
    %c1 = arith.constant 1 : index
    %13 = memref.load %arg1[%c1] : memref<2xf32, #tpu.memory_space<smem>>
    %14 = vector.broadcast %12 : f32 to vector<8x256xf32>
    %15 = arith.mulf %14, %5 : vector<8x256xf32>
    %16 = vector.broadcast %13 : f32 to vector<8x256xf32>
    %17 = arith.mulf %16, %11 : vector<8x256xf32>
    %18 = arith.addf %15, %17 : vector<8x256xf32>
    %19 = arith.truncf %18 : vector<8x256xf32> to vector<8x256xbf16>
    %c0_13 = arith.constant 0 : index
    %c0_14 = arith.constant 0 : index
    %20 = vector.load %arg8[%c0_13, %c0_14] : memref<256x128xbf16, #tpu.memory_space<vmem>>, vector<256x128xbf16>
    %cst_15 = arith.constant dense<0.000000e+00> : vector<8x128xf32>
    %21 = tpu.matmul %19, %20, %cst_15 {dimension_numbers = #tpu.dot_dimension_numbers<[1], [0], [0], [1], [0, 0, 1, 1], [], []>} : vector<8x256xbf16>, vector<256x128xbf16>, vector<8x128xf32> -> vector<8x128xf32>
    %c0_16 = arith.constant 0 : index
    %c0_17 = arith.constant 0 : index
    %22 = vector.load %arg9[%c0_16, %c0_17] : memref<1x128xf32, #tpu.memory_space<vmem>>, vector<1x128xf32>
    %23 = vector.broadcast %22 : vector<1x128xf32> to vector<8x128xf32>
    %24 = arith.addf %21, %23 : vector<8x128xf32>
    %c0_18 = arith.constant 0 : index
    %c0_19 = arith.constant 0 : index
    %25 = vector.load %arg10[%c0_18, %c0_19] : memref<8x256xf32, #tpu.memory_space<vmem>>, vector<8x256xf32>
    tpu.vector_store %arg10[%c0_18, %c0_19], %5 {strides = array<i32>} : memref<8x256xf32, #tpu.memory_space<vmem>>, vector<8x256xf32>,
    %c0_20 = arith.constant 0 : index
    %c0_21 = arith.constant 0 : index
    %26 = vector.load %arg11[%c0_20, %c0_21] : memref<8x256xf32, #tpu.memory_space<vmem>>, vector<8x256xf32>
    tpu.vector_store %arg11[%c0_20, %c0_21], %18 {strides = array<i32>} : memref<8x256xf32, #tpu.memory_space<vmem>>, vector<8x256xf32>,
    %c0_22 = arith.constant 0 : index
    %c0_23 = arith.constant 0 : index
    %27 = vector.load %arg12[%c0_22, %c0_23] : memref<8x128xf32, #tpu.memory_space<vmem>>, vector<8x128xf32>
    tpu.vector_store %arg12[%c0_22, %c0_23], %24 {strides = array<i32>} : memref<8x128xf32, #tpu.memory_space<vmem>>, vector<8x128xf32>,
    return
  }
  func.func @transform_0(%arg0: i32) -> i32 {
    %c0_i32 = arith.constant 0 : i32
    %c0_i32_0 = arith.constant 0 : i32
    return %c0_i32 : i32
  }
  func.func @transform_1(%arg0: i32) -> (i32, i32) {
    %c0_i32 = arith.constant 0 : i32
    %c0_i32_0 = arith.constant 0 : i32
    return %arg0, %c0_i32 : i32, i32
  }
  func.func @transform_2(%arg0: i32) -> (i32, i32) {
    %c0_i32 = arith.constant 0 : i32
    %c0_i32_0 = arith.constant 0 : i32
    return %arg0, %c0_i32 : i32, i32
  }
  func.func @transform_3(%arg0: i32) -> (i32, i32) {
    %c0_i32 = arith.constant 0 : i32
    %c0_i32_0 = arith.constant 0 : i32
    %c0_i32_1 = arith.constant 0 : i32
    return %c0_i32, %c0_i32_0 : i32, i32
  }
  func.func @transform_4(%arg0: i32) -> (i32, i32) {
    %c0_i32 = arith.constant 0 : i32
    %c0_i32_0 = arith.constant 0 : i32
    %c0_i32_1 = arith.constant 0 : i32
    return %c0_i32, %c0_i32_0 : i32, i32
  }
  func.func @transform_5(%arg0: i32) -> (i32, i32) {
    %c0_i32 = arith.constant 0 : i32
    %c0_i32_0 = arith.constant 0 : i32
    %c0_i32_1 = arith.constant 0 : i32
    return %c0_i32, %c0_i32_0 : i32, i32
  }
  func.func @transform_6(%arg0: i32) -> (i32, i32) {
    %c0_i32 = arith.constant 0 : i32
    %c0_i32_0 = arith.constant 0 : i32
    %c0_i32_1 = arith.constant 0 : i32
    return %c0_i32, %c0_i32_0 : i32, i32
  }
  func.func @transform_7(%arg0: i32) -> (i32, i32) {
    %c0_i32 = arith.constant 0 : i32
    %c0_i32_0 = arith.constant 0 : i32
    %c0_i32_1 = arith.constant 0 : i32
    return %c0_i32, %c0_i32_0 : i32, i32
  }
  func.func @transform_8(%arg0: i32) -> (i32, i32) {
    %c0_i32 = arith.constant 0 : i32
    %c0_i32_0 = arith.constant 0 : i32
    %c0_i32_1 = arith.constant 0 : i32
    return %c0_i32, %c0_i32_0 : i32, i32
  }
  func.func @transform_9(%arg0: i32) -> (i32, i32) {
    %c0_i32 = arith.constant 0 : i32
    %c0_i32_0 = arith.constant 0 : i32
    return %arg0, %c0_i32 : i32, i32
  }
  func.func @transform_10(%arg0: i32) -> (i32, i32) {
    %c0_i32 = arith.constant 0 : i32
    %c0_i32_0 = arith.constant 0 : i32
    return %arg0, %c0_i32 : i32, i32
  }
  func.func @transform_11(%arg0: i32) -> (i32, i32) {
    %c0_i32 = arith.constant 0 : i32
    %c0_i32_0 = arith.constant 0 : i32
    return %arg0, %c0_i32 : i32, i32
  }
}

</mosaic_0001>

<llo_original>
// kernel: feat_classifier_forward.1
$region0: #{feat_classifier_forward.1}
  #allocation0 [shape = 'u32[]', space=smem, size = 0x4, offset = 0x4, fixed_abs, tag = 'smem constant byte address 0x4 - core index']
  #allocation1 [shape = 'u32[72,128]{1,0:T(1,128)}', space=vmem, size = 0x9000, scoped, tag = 'internal scratch']
  %s0 = inlined_call_operand.vmem [shape: f32[2], index: 0, kind: input, shape index: {}]
  %s1 = inlined_call_operand.vmem [shape: bf16[8,512], index: 1, kind: input, shape index: {}]
  %s2 = inlined_call_operand.vmem [shape: bf16[8,512], index: 2, kind: input, shape index: {}]
  %s3 = inlined_call_operand.vmem [shape: bf16[512,256], index: 3, kind: input, shape index: {}]
  %s4 = inlined_call_operand.vmem [shape: f32[1,256], index: 4, kind: input, shape index: {}]
  %s5 = inlined_call_operand.vmem [shape: bf16[512,256], index: 5, kind: input, shape index: {}]
  %s6 = inlined_call_operand.vmem [shape: f32[1,256], index: 6, kind: input, shape index: {}]
  %s7 = inlined_call_operand.vmem [shape: bf16[256,128], index: 7, kind: input, shape index: {}]
  %s8 = inlined_call_operand.vmem [shape: f32[1,128], index: 8, kind: input, shape index: {}]
  %s9 = inlined_call_operand.hbm [shape: f32[8,256], index: 9, kind: output, shape index: {0}]
  %s10 = inlined_call_operand.hbm [shape: f32[8,256], index: 10, kind: output, shape index: {1}]
  %s11 = inlined_call_operand.hbm [shape: f32[8,128], index: 11, kind: output, shape index: {2}]
  %12 = xla_tuple %s9, %s10, %s11
  %s13 = sld [smem:[#allocation0]]
  $region66: #{feat_classifier_forward.1} parent=0
    _
  %s15 = ssub.s32 1, %s13
  %s16 = scalar_select 0, %s15, %s13
  $region1: #{feat_classifier_forward.1} parent=0
    #allocation2 [shape = 'u8[512]{0}', space=smem, size = 0x200, scoped, tag = 'input window, operand 0, single buffered']
    #allocation3 [shape = 's32[1]{0}', space=sflag, size = 0x4, scoped, tag = 'scoped memory for feat_classifier_forward.1']
    #allocation4 [shape = 's32[1]{0}', space=sflag, size = 0x4, scoped, tag = 'scoped memory for feat_classifier_forward.1']
    #allocation5 [shape = 'u8[8192]{0}', space=vmem, size = 0x2000, scoped, tag = 'output window, operand 0, single buffered']
    #allocation6 [shape = 'u8[8192]{0}', space=vmem, size = 0x2000, scoped, tag = 'output window, operand 1, single buffered']
    #allocation7 [shape = 's32[1]{0}', space=sflag, size = 0x4, scoped, tag = 'scoped memory for feat_classifier_forward.1']
    #allocation8 [shape = 'u8[4096]{0}', space=vmem, size = 0x1000, scoped, tag = 'output window, operand 2, single buffered']
    %17 = vsyncpa [#allocation4], 0
    %18 = vsyncpa [#allocation3], 0
    %19 = vsyncpa [#allocation7], 0
    // Predicated region
    $region2: #{feat_classifier_forward.1} parent=1 // pred_check
      _
    $region3: #{feat_classifier_forward.1} parent=1 // pred_check_branch
      %21 = sbr.rel (0) target = $region5
    $region4: #{feat_classifier_forward.1} parent=1 // pred_region
      %23 = vsyncadd [#allocation4], 0
      %s25 = sshll.u32 %s0, 4
      %s26 = int_to_ptr.vmem [resolvable:$true] %s25
      %28 = dma.vmem_to_smem %s26, 16, [#allocation2], [#allocation4]
    $region5: #{feat_classifier_forward.1} parent=1 // pred_fallthru
      _
    // Predicated region
    $region6: #{feat_classifier_forward.1} parent=1 // pred_check
      _
    $region7: #{feat_classifier_forward.1} parent=1 // pred_check_branch
      %30 = sbr.rel (0) target = $region9
    $region8: #{feat_classifier_forward.1} parent=1 // pred_region
      _
    $region9: #{feat_classifier_forward.1} parent=1 // pred_fallthru
      _
    // Predicated region
    $region10: #{feat_classifier_forward.1} parent=1 // pred_check
      _
    $region11: #{feat_classifier_forward.1} parent=1 // pred_check_branch
      %32 = sbr.rel (0) target = $region13
    $region12: #{feat_classifier_forward.1} parent=1 // pred_region
      _
    $region13: #{feat_classifier_forward.1} parent=1 // pred_fallthru
      _
    // Predicated region
    $region14: #{feat_classifier_forward.1} parent=1 // pred_check
      _
    $region15: #{feat_classifier_forward.1} parent=1 // pred_check_branch
      %34 = sbr.rel (0) target = $region17
    $region16: #{feat_classifier_forward.1} parent=1 // pred_region
      _
    $region17: #{feat_classifier_forward.1} parent=1 // pred_fallthru
      _
    // Predicated region
    $region18: #{feat_classifier_forward.1} parent=1 // pred_check
      _
    $region19: #{feat_classifier_forward.1} parent=1 // pred_check_branch
      %36 = sbr.rel (0) target = $region21
    $region20: #{feat_classifier_forward.1} parent=1 // pred_region
      _
    $region21: #{feat_classifier_forward.1} parent=1 // pred_fallthru
      _
    // Predicated region
    $region22: #{feat_classifier_forward.1} parent=1 // pred_check
      _
    $region23: #{feat_classifier_forward.1} parent=1 // pred_check_branch
      %38 = sbr.rel (0) target = $region25
    $region24: #{feat_classifier_forward.1} parent=1 // pred_region
      _
    $region25: #{feat_classifier_forward.1} parent=1 // pred_fallthru
      _
    // Predicated region
    $region26: #{feat_classifier_forward.1} parent=1 // pred_check
      _
    $region27: #{feat_classifier_forward.1} parent=1 // pred_check_branch
      %40 = sbr.rel (0) target = $region29
    $region28: #{feat_classifier_forward.1} parent=1 // pred_region
      _
    $region29: #{feat_classifier_forward.1} parent=1 // pred_fallthru
      _
    // Predicated region
    $region30: #{feat_classifier_forward.1} parent=1 // pred_check
      _
    $region31: #{feat_classifier_forward.1} parent=1 // pred_check_branch
      %42 = sbr.rel (0) target = $region33
    $region32: #{feat_classifier_forward.1} parent=1 // pred_region
      _
    $region33: #{feat_classifier_forward.1} parent=1 // pred_fallthru
      _
    // Predicated region
    $region34: #{feat_classifier_forward.1} parent=1 // pred_check
      _
    $region35: #{feat_classifier_forward.1} parent=1 // pred_check_branch
      %44 = sbr.rel (0) target = $region37
    $region36: #{feat_classifier_forward.1} parent=1 // pred_region
      _
    $region37: #{feat_classifier_forward.1} parent=1 // pred_fallthru
      _
    // Predicated region
    $region38: #{feat_classifier_forward.1} parent=1 // pred_check
      _
    $region39: #{feat_classifier_forward.1} parent=1 // pred_check_branch
      %46 = sbr.rel (0) target = $region41
    $region40: #{feat_classifier_forward.1} parent=1 // pred_region
      %48 = dma.done [#allocation4], 16
    $region41: #{feat_classifier_forward.1} parent=1 // pred_fallthru
      _
    %49 = sfence
    %v50 = vld [vmem:[%s1] sm:$0xff]
    %v51 = vld [vmem:[%s1 + $0x8] sm:$0xff]
    %v52 = vld [vmem:[%s3] sm:$0xff]
    %v53 = vld [vmem:[%s3 + $0x8] sm:$0xff]
    %v54 = vld [vmem:[%s3 + $0x10] sm:$0xff]
    %v55 = vld [vmem:[%s3 + $0x18] sm:$0xff]
    %v56 = vld [vmem:[%s3 + $0x20] sm:$0xff]
    %v57 = vld [vmem:[%s3 + $0x28] sm:$0xff]
    %v58 = vld [vmem:[%s3 + $0x30] sm:$0xff]
    %v59 = vld [vmem:[%s3 + $0x38] sm:$0xff]
    %v60 = vld [vmem:[%s3 + $0x40] sm:$0xff]
    %v61 = vld [vmem:[%s3 + $0x48] sm:$0xff]
    %v62 = vld [vmem:[%s3 + $0x50] sm:$0xff]
    %v63 = vld [vmem:[%s3 + $0x58] sm:$0xff]
    %v64 = vld [vmem:[%s3 + $0x60] sm:$0xff]
    %v65 = vld [vmem:[%s3 + $0x68] sm:$0xff]
    %v66 = vld [vmem:[%s3 + $0x70] sm:$0xff]
    %v67 = vld [vmem:[%s3 + $0x78] sm:$0xff]
    %v68 = vld [vmem:[%s3 + $0x80] sm:$0xff]
    %v69 = vld [vmem:[%s3 + $0x88] sm:$0xff]
    %v70 = vld [vmem:[%s3 + $0x90] sm:$0xff]
    %v71 = vld [vmem:[%s3 + $0x98] sm:$0xff]
    %v72 = vld [vmem:[%s3 + $0xa0] sm:$0xff]
    %v73 = vld [vmem:[%s3 + $0xa8] sm:$0xff]
    %v74 = vld [vmem:[%s3 + $0xb0] sm:$0xff]
    %v75 = vld [vmem:[%s3 + $0xb8] sm:$0xff]
    %v76 = vld [vmem:[%s3 + $0xc0] sm:$0xff]
    %v77 = vld [vmem:[%s3 + $0xc8] sm:$0xff]
    %v78 = vld [vmem:[%s3 + $0xd0] sm:$0xff]
    %v79 = vld [vmem:[%s3 + $0xd8] sm:$0xff]
    %v80 = vld [vmem:[%s3 + $0xe0] sm:$0xff]
    %v81 = vld [vmem:[%s3 + $0xe8] sm:$0xff]
    %v82 = vld [vmem:[%s3 + $0xf0] sm:$0xff]
    %v83 = vld [vmem:[%s3 + $0xf8] sm:$0xff]
    %v84 = vld [vmem:[%s3 + $0x100] sm:$0xff]
    %v85 = vld [vmem:[%s3 + $0x108] sm:$0xff]
    %v86 = vld [vmem:[%s3 + $0x110] sm:$0xff]
    %v87 = vld [vmem:[%s3 + $0x118] sm:$0xff]
    %v88 = vld [vmem:[%s3 + $0x120] sm:$0xff]
    %v89 = vld [vmem:[%s3 + $0x128] sm:$0xff]
    %v90 = vld [vmem:[%s3 + $0x130] sm:$0xff]
    %v91 = vld [vmem:[%s3 + $0x138] sm:$0xff]
    %v92 = vld [vmem:[%s3 + $0x140] sm:$0xff]
    %v93 = vld [vmem:[%s3 + $0x148] sm:$0xff]
    %v94 = vld [vmem:[%s3 + $0x150] sm:$0xff]
    %v95 = vld [vmem:[%s3 + $0x158] sm:$0xff]
    %v96 = vld [vmem:[%s3 + $0x160] sm:$0xff]
    %v97 = vld [vmem:[%s3 + $0x168] sm:$0xff]
    %v98 = vld [vmem:[%s3 + $0x170] sm:$0xff]
    %v99 = vld [vmem:[%s3 + $0x178] sm:$0xff]
    %v100 = vld [vmem:[%s3 + $0x180] sm:$0xff]
    %v101 = vld [vmem:[%s3 + $0x188] sm:$0xff]
    %v102 = vld [vmem:[%s3 + $0x190] sm:$0xff]
    %v103 = vld [vmem:[%s3 + $0x198] sm:$0xff]
    %v104 = vld [vmem:[%s3 + $0x1a0] sm:$0xff]
    %v105 = vld [vmem:[%s3 + $0x1a8] sm:$0xff]
    %v106 = vld [vmem:[%s3 + $0x1b0] sm:$0xff]
    %v107 = vld [vmem:[%s3 + $0x1b8] sm:$0xff]
    %v108 = vld [vmem:[%s3 + $0x1c0] sm:$0xff]
    %v109 = vld [vmem:[%s3 + $0x1c8] sm:$0xff]
    %v110 = vld [vmem:[%s3 + $0x1d0] sm:$0xff]
    %v111 = vld [vmem:[%s3 + $0x1d8] sm:$0xff]
    %v112 = vld [vmem:[%s3 + $0x1e0] sm:$0xff]
    %v113 = vld [vmem:[%s3 + $0x1e8] sm:$0xff]
    %v114 = vld [vmem:[%s3 + $0x1f0] sm:$0xff]
    %v115 = vld [vmem:[%s3 + $0x1f8] sm:$0xff]
    %v116 = vld [vmem:[%s4] sm:$0x3]
    %v118 = vperm.slane %v116, 0
    %v119 = vperm.slane %v116, 1
    %v124 = vunpack.c.l.b16 %v50
    %v125 = vunpack.c.h.b16 %v50
    %v126 = vunpack.c.l.b16 %v51
    %v127 = vunpack.c.h.b16 %v51
    %v128 = vpack.c.b16 %v124, %v124
    %v129 = vpack.c.b16 %v125, %v125
    %v130 = vpack.c.b16 %v126, %v126
    %v131 = vpack.c.b16 %v127, %v127
    %v200 = vunpack.c.l.b16 %v52
    %v201 = vunpack.c.h.b16 %v52
    %v202 = vunpack.c.l.b16 %v53
    %v203 = vunpack.c.h.b16 %v53
    %v204 = vunpack.c.l.b16 %v54
    %v205 = vunpack.c.h.b16 %v54
    %v206 = vunpack.c.l.b16 %v55
    %v207 = vunpack.c.h.b16 %v55
    %v208 = vunpack.c.l.b16 %v56
    %v209 = vunpack.c.h.b16 %v56
    %v210 = vunpack.c.l.b16 %v57
    %v211 = vunpack.c.h.b16 %v57
    %v212 = vunpack.c.l.b16 %v58
    %v213 = vunpack.c.h.b16 %v58
    %v214 = vunpack.c.l.b16 %v59
    %v215 = vunpack.c.h.b16 %v59
    %v216 = vunpack.c.l.b16 %v60
    %v217 = vunpack.c.h.b16 %v60
    %v218 = vunpack.c.l.b16 %v61
    %v219 = vunpack.c.h.b16 %v61
    %v220 = vunpack.c.l.b16 %v62
    %v221 = vunpack.c.h.b16 %v62
    %v222 = vunpack.c.l.b16 %v63
    %v223 = vunpack.c.h.b16 %v63
    %v224 = vunpack.c.l.b16 %v64
    %v225 = vunpack.c.h.b16 %v64
    %v226 = vunpack.c.l.b16 %v65
    %v227 = vunpack.c.h.b16 %v65
    %v228 = vunpack.c.l.b16 %v66
    %v229 = vunpack.c.h.b16 %v66
    %v230 = vunpack.c.l.b16 %v67
    %v231 = vunpack.c.h.b16 %v67
    %v232 = vunpack.c.l.b16 %v68
    %v233 = vunpack.c.h.b16 %v68
    %v234 = vunpack.c.l.b16 %v69
    %v235 = vunpack.c.h.b16 %v69
    %v236 = vunpack.c.l.b16 %v70
    %v237 = vunpack.c.h.b16 %v70
    %v238 = vunpack.c.l.b16 %v71
    %v239 = vunpack.c.h.b16 %v71
    %v240 = vunpack.c.l.b16 %v72
    %v241 = vunpack.c.h.b16 %v72
    %v242 = vunpack.c.l.b16 %v73
    %v243 = vunpack.c.h.b16 %v73
    %v244 = vunpack.c.l.b16 %v74
    %v245 = vunpack.c.h.b16 %v74
    %v246 = vunpack.c.l.b16 %v75
    %v247 = vunpack.c.h.b16 %v75
    %v248 = vunpack.c.l.b16 %v76
    %v249 = vunpack.c.h.b16 %v76
    %v250 = vunpack.c.l.b16 %v77
    %v251 = vunpack.c.h.b16 %v77
    %v252 = vunpack.c.l.b16 %v78
    %v253 = vunpack.c.h.b16 %v78
    %v254 = vunpack.c.l.b16 %v79
    %v255 = vunpack.c.h.b16 %v79
    %v256 = vunpack.c.l.b16 %v80
    %v257 = vunpack.c.h.b16 %v80
    %v258 = vunpack.c.l.b16 %v81
    %v259 = vunpack.c.h.b16 %v81
    %v260 = vunpack.c.l.b16 %v82
    %v261 = vunpack.c.h.b16 %v82
    %v262 = vunpack.c.l.b16 %v83
    %v263 = vunpack.c.h.b16 %v83
    %v264 = vunpack.c.l.b16 %v84
    %v265 = vunpack.c.h.b16 %v84
    %v266 = vunpack.c.l.b16 %v85
    %v267 = vunpack.c.h.b16 %v85
    %v268 = vunpack.c.l.b16 %v86
    %v269 = vunpack.c.h.b16 %v86
    %v270 = vunpack.c.l.b16 %v87
    %v271 = vunpack.c.h.b16 %v87
    %v272 = vunpack.c.l.b16 %v88
    %v273 = vunpack.c.h.b16 %v88
    %v274 = vunpack.c.l.b16 %v89
    %v275 = vunpack.c.h.b16 %v89
    %v276 = vunpack.c.l.b16 %v90
    %v277 = vunpack.c.h.b16 %v90
    %v278 = vunpack.c.l.b16 %v91
    %v279 = vunpack.c.h.b16 %v91
    %v280 = vunpack.c.l.b16 %v92
    %v281 = vunpack.c.h.b16 %v92
    %v282 = vunpack.c.l.b16 %v93
    %v283 = vunpack.c.h.b16 %v93
    %v284 = vunpack.c.l.b16 %v94
    %v285 = vunpack.c.h.b16 %v94
    %v286 = vunpack.c.l.b16 %v95
    %v287 = vunpack.c.h.b16 %v95
    %v288 = vunpack.c.l.b16 %v96
    %v289 = vunpack.c.h.b16 %v96
    %v290 = vunpack.c.l.b16 %v97
    %v291 = vunpack.c.h.b16 %v97
    %v292 = vunpack.c.l.b16 %v98
    %v293 = vunpack.c.h.b16 %v98
    %v294 = vunpack.c.l.b16 %v99
    %v295 = vunpack.c.h.b16 %v99
    %v296 = vunpack.c.l.b16 %v100
    %v297 = vunpack.c.h.b16 %v100
    %v298 = vunpack.c.l.b16 %v101
    %v299 = vunpack.c.h.b16 %v101
    %v300 = vunpack.c.l.b16 %v102
    %v301 = vunpack.c.h.b16 %v102
    %v302 = vunpack.c.l.b16 %v103
    %v303 = vunpack.c.h.b16 %v103
    %v304 = vunpack.c.l.b16 %v104
    %v305 = vunpack.c.h.b16 %v104
    %v306 = vunpack.c.l.b16 %v105
    %v307 = vunpack.c.h.b16 %v105
    %v308 = vunpack.c.l.b16 %v106
    %v309 = vunpack.c.h.b16 %v106
    %v310 = vunpack.c.l.b16 %v107
    %v311 = vunpack.c.h.b16 %v107
    %v312 = vunpack.c.l.b16 %v108
    %v313 = vunpack.c.h.b16 %v108
    %v314 = vunpack.c.l.b16 %v109
    %v315 = vunpack.c.h.b16 %v109
    %v316 = vunpack.c.l.b16 %v110
    %v317 = vunpack.c.h.b16 %v110
    %v318 = vunpack.c.l.b16 %v111
    %v319 = vunpack.c.h.b16 %v111
    %v320 = vunpack.c.l.b16 %v112
    %v321 = vunpack.c.h.b16 %v112
    %v322 = vunpack.c.l.b16 %v113
    %v323 = vunpack.c.h.b16 %v113
    %v324 = vunpack.c.l.b16 %v114
    %v325 = vunpack.c.h.b16 %v114
    %v326 = vunpack.c.l.b16 %v115
    %v327 = vunpack.c.h.b16 %v115
    %v328 = vpack.c.b16 %v202, %v200
    %v329 = vpack.c.b16 %v203, %v201
    %v330 = vpack.c.b16 %v206, %v204
    %v331 = vpack.c.b16 %v207, %v205
    %v332 = vpack.c.b16 %v210, %v208
    %v333 = vpack.c.b16 %v211, %v209
    %v334 = vpack.c.b16 %v214, %v212
    %v335 = vpack.c.b16 %v215, %v213
    %v336 = vpack.c.b16 %v218, %v216
    %v337 = vpack.c.b16 %v219, %v217
    %v338 = vpack.c.b16 %v222, %v220
    %v339 = vpack.c.b16 %v223, %v221
    %v340 = vpack.c.b16 %v226, %v224
    %v341 = vpack.c.b16 %v227, %v225
    %v342 = vpack.c.b16 %v230, %v228
    %v343 = vpack.c.b16 %v231, %v229
    %v344 = vpack.c.b16 %v234, %v232
    %v345 = vpack.c.b16 %v235, %v233
    %v346 = vpack.c.b16 %v238, %v236
    %v347 = vpack.c.b16 %v239, %v237
    %v348 = vpack.c.b16 %v242, %v240
    %v349 = vpack.c.b16 %v243, %v241
    %v350 = vpack.c.b16 %v246, %v244
    %v351 = vpack.c.b16 %v247, %v245
    %v352 = vpack.c.b16 %v250, %v248
    %v353 = vpack.c.b16 %v251, %v249
    %v354 = vpack.c.b16 %v254, %v252
    %v355 = vpack.c.b16 %v255, %v253
    %v356 = vpack.c.b16 %v258, %v256
    %v357 = vpack.c.b16 %v259, %v257
    %v358 = vpack.c.b16 %v262, %v260
    %v359 = vpack.c.b16 %v263, %v261
    %v360 = vpack.c.b16 %v266, %v264
    %v361 = vpack.c.b16 %v267, %v265
    %v362 = vpack.c.b16 %v270, %v268
    %v363 = vpack.c.b16 %v271, %v269
    %v364 = vpack.c.b16 %v274, %v272
    %v365 = vpack.c.b16 %v275, %v273
    %v366 = vpack.c.b16 %v278, %v276
    %v367 = vpack.c.b16 %v279, %v277
    %v368 = vpack.c.b16 %v282, %v280
    %v369 = vpack.c.b16 %v283, %v281
    %v370 = vpack.c.b16 %v286, %v284
    %v371 = vpack.c.b16 %v287, %v285
    %v372 = vpack.c.b16 %v290, %v288
    %v373 = vpack.c.b16 %v291, %v289
    %v374 = vpack.c.b16 %v294, %v292
    %v375 = vpack.c.b16 %v295, %v293
    %v376 = vpack.c.b16 %v298, %v296
    %v377 = vpack.c.b16 %v299, %v297
    %v378 = vpack.c.b16 %v302, %v300
    %v379 = vpack.c.b16 %v303, %v301
    %v380 = vpack.c.b16 %v306, %v304
    %v381 = vpack.c.b16 %v307, %v305
    %v382 = vpack.c.b16 %v310, %v308
    %v383 = vpack.c.b16 %v311, %v309
    %v384 = vpack.c.b16 %v314, %v312
    %v385 = vpack.c.b16 %v315, %v313
    %v386 = vpack.c.b16 %v318, %v316
    %v387 = vpack.c.b16 %v319, %v317
    %v388 = vpack.c.b16 %v322, %v320
    %v389 = vpack.c.b16 %v323, %v321
    %v390 = vpack.c.b16 %v326, %v324
    %v391 = vpack.c.b16 %v327, %v325
    %456 = vmatpush.bf16.msra.mxu0 %v342
    %457 = vmatpush.bf16.msra.mxu0 %v340
    %458 = vmatpush.bf16.msra.mxu0 %v338
    %459 = vmatpush.bf16.msra.mxu0 %v336
    %460 = vmatpush.bf16.msra.mxu0 %v334
    %461 = vmatpush.bf16.msra.mxu0 %v332
    %462 = vmatpush.bf16.msra.mxu0 %v330
    %463 = vmatpush.bf16.msra.mxu0 %v328
    %464 = vmatmul.bf16.gmra.mxu0 %v128
    %v465 = vpop.f32.mrf.mxu0
    %v466 = vadd.f32 %v118, %v465
    %v467 = vpop.f32.mrf.mxu0
    %468 = vdwg.mxu0
    %469 = vmatpush.bf16.msra.mxu0 %v358
    %470 = vmatpush.bf16.msra.mxu0 %v356
    %471 = vmatpush.bf16.msra.mxu0 %v354
    %472 = vmatpush.bf16.msra.mxu0 %v352
    %473 = vmatpush.bf16.msra.mxu0 %v350
    %474 = vmatpush.bf16.msra.mxu0 %v348
    %475 = vmatpush.bf16.msra.mxu0 %v346
    %476 = vmatpush.bf16.msra.mxu0 %v344
    %477 = vmatmul.bf16.gmra.mxu0 %v129
    %v478 = vpop.f32.mrf.mxu0
    %v479 = vadd.f32 %v466, %v478
    %v480 = vpop.f32.mrf.mxu0
    %481 = vdwg.mxu0
    %482 = vmatpush.bf16.msra.mxu0 %v374
    %483 = vmatpush.bf16.msra.mxu0 %v372
    %484 = vmatpush.bf16.msra.mxu0 %v370
    %485 = vmatpush.bf16.msra.mxu0 %v368
    %486 = vmatpush.bf16.msra.mxu0 %v366
    %487 = vmatpush.bf16.msra.mxu0 %v364
    %488 = vmatpush.bf16.msra.mxu0 %v362
    %489 = vmatpush.bf16.msra.mxu0 %v360
    %490 = vmatmul.bf16.gmra.mxu0 %v130
    %v491 = vpop.f32.mrf.mxu0
    %v492 = vadd.f32 %v479, %v491
    %v493 = vpop.f32.mrf.mxu0
    %494 = vdwg.mxu0
    %495 = vmatpush.bf16.msra.mxu0 %v390
    %496 = vmatpush.bf16.msra.mxu0 %v388
    %497 = vmatpush.bf16.msra.mxu0 %v386
    %498 = vmatpush.bf16.msra.mxu0 %v384
    %499 = vmatpush.bf16.msra.mxu0 %v382
    %500 = vmatpush.bf16.msra.mxu0 %v380
    %501 = vmatpush.bf16.msra.mxu0 %v378
    %502 = vmatpush.bf16.msra.mxu0 %v376
    %503 = vmatmul.bf16.gmra.mxu0 %v131
    %v504 = vpop.f32.mrf.mxu0
    %v505 = vadd.f32 %v492, %v504
    %v506 = vpop.f32.mrf.mxu0
    %507 = vdwg.mxu0
    %508 = vmatpush.bf16.msra.mxu0 %v343
    %509 = vmatpush.bf16.msra.mxu0 %v341
    %510 = vmatpush.bf16.msra.mxu0 %v339
    %511 = vmatpush.bf16.msra.mxu0 %v337
    %512 = vmatpush.bf16.msra.mxu0 %v335
    %513 = vmatpush.bf16.msra.mxu0 %v333
    %514 = vmatpush.bf16.msra.mxu0 %v331
    %515 = vmatpush.bf16.msra.mxu0 %v329
    %516 = vmatmul.bf16.gmra.mxu0 %v128
    %v517 = vpop.f32.mrf.mxu0
    %v518 = vadd.f32 %v119, %v517
    %v519 = vpop.f32.mrf.mxu0
    %520 = vdwg.mxu0
    %521 = vmatpush.bf16.msra.mxu0 %v359
    %522 = vmatpush.bf16.msra.mxu0 %v357
    %523 = vmatpush.bf16.msra.mxu0 %v355
    %524 = vmatpush.bf16.msra.mxu0 %v353
    %525 = vmatpush.bf16.msra.mxu0 %v351
    %526 = vmatpush.bf16.msra.mxu0 %v349
    %527 = vmatpush.bf16.msra.mxu0 %v347
    %528 = vmatpush.bf16.msra.mxu0 %v345
    %529 = vmatmul.bf16.gmra.mxu0 %v129
    %v530 = vpop.f32.mrf.mxu0
    %v531 = vadd.f32 %v518, %v530
    %v532 = vpop.f32.mrf.mxu0
    %533 = vdwg.mxu0
    %534 = vmatpush.bf16.msra.mxu0 %v375
    %535 = vmatpush.bf16.msra.mxu0 %v373
    %536 = vmatpush.bf16.msra.mxu0 %v371
    %537 = vmatpush.bf16.msra.mxu0 %v369
    %538 = vmatpush.bf16.msra.mxu0 %v367
    %539 = vmatpush.bf16.msra.mxu0 %v365
    %540 = vmatpush.bf16.msra.mxu0 %v363
    %541 = vmatpush.bf16.msra.mxu0 %v361
    %542 = vmatmul.bf16.gmra.mxu0 %v130
    %v543 = vpop.f32.mrf.mxu0
    %v544 = vadd.f32 %v531, %v543
    %v545 = vpop.f32.mrf.mxu0
    %546 = vdwg.mxu0
    %547 = vmatpush.bf16.msra.mxu0 %v391
    %548 = vmatpush.bf16.msra.mxu0 %v389
    %549 = vmatpush.bf16.msra.mxu0 %v387
    %550 = vmatpush.bf16.msra.mxu0 %v385
    %551 = vmatpush.bf16.msra.mxu0 %v383
    %552 = vmatpush.bf16.msra.mxu0 %v381
    %553 = vmatpush.bf16.msra.mxu0 %v379
    %554 = vmatpush.bf16.msra.mxu0 %v377
    %555 = vmatmul.bf16.gmra.mxu0 %v131
    %v556 = vpop.f32.mrf.mxu0
    %v557 = vadd.f32 %v544, %v556
    %v558 = vpop.f32.mrf.mxu0
    %559 = vdwg.mxu0
    %v560 = vld [vmem:[%s2] sm:$0xff]
    %v561 = vld [vmem:[%s2 + $0x8] sm:$0xff]
    %v562 = vld [vmem:[%s5] sm:$0xff]
    %v563 = vld [vmem:[%s5 + $0x8] sm:$0xff]
    %v564 = vld [vmem:[%s5 + $0x10] sm:$0xff]
    %v565 = vld [vmem:[%s5 + $0x18] sm:$0xff]
    %v566 = vld [vmem:[%s5 + $0x20] sm:$0xff]
    %v567 = vld [vmem:[%s5 + $0x28] sm:$0xff]
    %v568 = vld [vmem:[%s5 + $0x30] sm:$0xff]
    %v569 = vld [vmem:[%s5 + $0x38] sm:$0xff]
    %v570 = vld [vmem:[%s5 + $0x40] sm:$0xff]
    %v571 = vld [vmem:[%s5 + $0x48] sm:$0xff]
    %v572 = vld [vmem:[%s5 + $0x50] sm:$0xff]
    %v573 = vld [vmem:[%s5 + $0x58] sm:$0xff]
    %v574 = vld [vmem:[%s5 + $0x60] sm:$0xff]
    %v575 = vld [vmem:[%s5 + $0x68] sm:$0xff]
    %v576 = vld [vmem:[%s5 + $0x70] sm:$0xff]
    %v577 = vld [vmem:[%s5 + $0x78] sm:$0xff]
    %v578 = vld [vmem:[%s5 + $0x80] sm:$0xff]
    %v579 = vld [vmem:[%s5 + $0x88] sm:$0xff]
    %v580 = vld [vmem:[%s5 + $0x90] sm:$0xff]
    %v581 = vld [vmem:[%s5 + $0x98] sm:$0xff]
    %v582 = vld [vmem:[%s5 + $0xa0] sm:$0xff]
    %v583 = vld [vmem:[%s5 + $0xa8] sm:$0xff]
    %v584 = vld [vmem:[%s5 + $0xb0] sm:$0xff]
    %v585 = vld [vmem:[%s5 + $0xb8] sm:$0xff]
    %v586 = vld [vmem:[%s5 + $0xc0] sm:$0xff]
    %v587 = vld [vmem:[%s5 + $0xc8] sm:$0xff]
    %v588 = vld [vmem:[%s5 + $0xd0] sm:$0xff]
    %v589 = vld [vmem:[%s5 + $0xd8] sm:$0xff]
    %v590 = vld [vmem:[%s5 + $0xe0] sm:$0xff]
    %v591 = vld [vmem:[%s5 + $0xe8] sm:$0xff]
    %v592 = vld [vmem:[%s5 + $0xf0] sm:$0xff]
    %v593 = vld [vmem:[%s5 + $0xf8] sm:$0xff]
    %v594 = vld [vmem:[%s5 + $0x100] sm:$0xff]
    %v595 = vld [vmem:[%s5 + $0x108] sm:$0xff]
    %v596 = vld [vmem:[%s5 + $0x110] sm:$0xff]
    %v597 = vld [vmem:[%s5 + $0x118] sm:$0xff]
    %v598 = vld [vmem:[%s5 + $0x120] sm:$0xff]
    %v599 = vld [vmem:[%s5 + $0x128] sm:$0xff]
    %v600 = vld [vmem:[%s5 + $0x130] sm:$0xff]
    %v601 = vld [vmem:[%s5 + $0x138] sm:$0xff]
    %v602 = vld [vmem:[%s5 + $0x140] sm:$0xff]
    %v603 = vld [vmem:[%s5 + $0x148] sm:$0xff]
    %v604 = vld [vmem:[%s5 + $0x150] sm:$0xff]
    %v605 = vld [vmem:[%s5 + $0x158] sm:$0xff]
    %v606 = vld [vmem:[%s5 + $0x160] sm:$0xff]
    %v607 = vld [vmem:[%s5 + $0x168] sm:$0xff]
    %v608 = vld [vmem:[%s5 + $0x170] sm:$0xff]
    %v609 = vld [vmem:[%s5 + $0x178] sm:$0xff]
    %v610 = vld [vmem:[%s5 + $0x180] sm:$0xff]
    %v611 = vld [vmem:[%s5 + $0x188] sm:$0xff]
    %v612 = vld [vmem:[%s5 + $0x190] sm:$0xff]
    %v613 = vld [vmem:[%s5 + $0x198] sm:$0xff]
    %v614 = vld [vmem:[%s5 + $0x1a0] sm:$0xff]
    %v615 = vld [vmem:[%s5 + $0x1a8] sm:$0xff]
    %v616 = vld [vmem:[%s5 + $0x1b0] sm:$0xff]
    %v617 = vld [vmem:[%s5 + $0x1b8] sm:$0xff]
    %v618 = vld [vmem:[%s5 + $0x1c0] sm:$0xff]
    %v619 = vld [vmem:[%s5 + $0x1c8] sm:$0xff]
    %v620 = vld [vmem:[%s5 + $0x1d0] sm:$0xff]
    %v621 = vld [vmem:[%s5 + $0x1d8] sm:$0xff]
    %v622 = vld [vmem:[%s5 + $0x1e0] sm:$0xff]
    %v623 = vld [vmem:[%s5 + $0x1e8] sm:$0xff]
    %v624 = vld [vmem:[%s5 + $0x1f0] sm:$0xff]
    %v625 = vld [vmem:[%s5 + $0x1f8] sm:$0xff]
    %v626 = vld [vmem:[%s6] sm:$0x3]
    %v628 = vperm.slane %v626, 0
    %v629 = vperm.slane %v626, 1
    %v634 = vunpack.c.l.b16 %v560
    %v635 = vunpack.c.h.b16 %v560
    %v636 = vunpack.c.l.b16 %v561
    %v637 = vunpack.c.h.b16 %v561
    %v638 = vpack.c.b16 %v634, %v634
    %v639 = vpack.c.b16 %v635, %v635
    %v640 = vpack.c.b16 %v636, %v636
    %v641 = vpack.c.b16 %v637, %v637
    %v710 = vunpack.c.l.b16 %v562
    %v711 = vunpack.c.h.b16 %v562
    %v712 = vunpack.c.l.b16 %v563
    %v713 = vunpack.c.h.b16 %v563
    %v714 = vunpack.c.l.b16 %v564
    %v715 = vunpack.c.h.b16 %v564
    %v716 = vunpack.c.l.b16 %v565
    %v717 = vunpack.c.h.b16 %v565
    %v718 = vunpack.c.l.b16 %v566
    %v719 = vunpack.c.h.b16 %v566
    %v720 = vunpack.c.l.b16 %v567
    %v721 = vunpack.c.h.b16 %v567
    %v722 = vunpack.c.l.b16 %v568
    %v723 = vunpack.c.h.b16 %v568
    %v724 = vunpack.c.l.b16 %v569
    %v725 = vunpack.c.h.b16 %v569
    %v726 = vunpack.c.l.b16 %v570
    %v727 = vunpack.c.h.b16 %v570
    %v728 = vunpack.c.l.b16 %v571
    %v729 = vunpack.c.h.b16 %v571
    %v730 = vunpack.c.l.b16 %v572
    %v731 = vunpack.c.h.b16 %v572
    %v732 = vunpack.c.l.b16 %v573
    %v733 = vunpack.c.h.b16 %v573
    %v734 = vunpack.c.l.b16 %v574
    %v735 = vunpack.c.h.b16 %v574
    %v736 = vunpack.c.l.b16 %v575
    %v737 = vunpack.c.h.b16 %v575
    %v738 = vunpack.c.l.b16 %v576
    %v739 = vunpack.c.h.b16 %v576
    %v740 = vunpack.c.l.b16 %v577
    %v741 = vunpack.c.h.b16 %v577
    %v742 = vunpack.c.l.b16 %v578
    %v743 = vunpack.c.h.b16 %v578
    %v744 = vunpack.c.l.b16 %v579
    %v745 = vunpack.c.h.b16 %v579
    %v746 = vunpack.c.l.b16 %v580
    %v747 = vunpack.c.h.b16 %v580
    %v748 = vunpack.c.l.b16 %v581
    %v749 = vunpack.c.h.b16 %v581
    %v750 = vunpack.c.l.b16 %v582
    %v751 = vunpack.c.h.b16 %v582
    %v752 = vunpack.c.l.b16 %v583
    %v753 = vunpack.c.h.b16 %v583
    %v754 = vunpack.c.l.b16 %v584
    %v755 = vunpack.c.h.b16 %v584
    %v756 = vunpack.c.l.b16 %v585
    %v757 = vunpack.c.h.b16 %v585
    %v758 = vunpack.c.l.b16 %v586
    %v759 = vunpack.c.h.b16 %v586
    %v760 = vunpack.c.l.b16 %v587
    %v761 = vunpack.c.h.b16 %v587
    %v762 = vunpack.c.l.b16 %v588
    %v763 = vunpack.c.h.b16 %v588
    %v764 = vunpack.c.l.b16 %v589
    %v765 = vunpack.c.h.b16 %v589
    %v766 = vunpack.c.l.b16 %v590
    %v767 = vunpack.c.h.b16 %v590
    %v768 = vunpack.c.l.b16 %v591
    %v769 = vunpack.c.h.b16 %v591
    %v770 = vunpack.c.l.b16 %v592
    %v771 = vunpack.c.h.b16 %v592
    %v772 = vunpack.c.l.b16 %v593
    %v773 = vunpack.c.h.b16 %v593
    %v774 = vunpack.c.l.b16 %v594
    %v775 = vunpack.c.h.b16 %v594
    %v776 = vunpack.c.l.b16 %v595
    %v777 = vunpack.c.h.b16 %v595
    %v778 = vunpack.c.l.b16 %v596
    %v779 = vunpack.c.h.b16 %v596
    %v780 = vunpack.c.l.b16 %v597
    %v781 = vunpack.c.h.b16 %v597
    %v782 = vunpack.c.l.b16 %v598
    %v783 = vunpack.c.h.b16 %v598
    %v784 = vunpack.c.l.b16 %v599
    %v785 = vunpack.c.h.b16 %v599
    %v786 = vunpack.c.l.b16 %v600
    %v787 = vunpack.c.h.b16 %v600
    %v788 = vunpack.c.l.b16 %v601
    %v789 = vunpack.c.h.b16 %v601
    %v790 = vunpack.c.l.b16 %v602
    %v791 = vunpack.c.h.b16 %v602
    %v792 = vunpack.c.l.b16 %v603
    %v793 = vunpack.c.h.b16 %v603
    %v794 = vunpack.c.l.b16 %v604
    %v795 = vunpack.c.h.b16 %v604
    %v796 = vunpack.c.l.b16 %v605
    %v797 = vunpack.c.h.b16 %v605
    %v798 = vunpack.c.l.b16 %v606
    %v799 = vunpack.c.h.b16 %v606
    %v800 = vunpack.c.l.b16 %v607
    %v801 = vunpack.c.h.b16 %v607
    %v802 = vunpack.c.l.b16 %v608
    %v803 = vunpack.c.h.b16 %v608
    %v804 = vunpack.c.l.b16 %v609
    %v805 = vunpack.c.h.b16 %v609
    %v806 = vunpack.c.l.b16 %v610
    %v807 = vunpack.c.h.b16 %v610
    %v808 = vunpack.c.l.b16 %v611
    %v809 = vunpack.c.h.b16 %v611
    %v810 = vunpack.c.l.b16 %v612
    %v811 = vunpack.c.h.b16 %v612
    %v812 = vunpack.c.l.b16 %v613
    %v813 = vunpack.c.h.b16 %v613
    %v814 = vunpack.c.l.b16 %v614
    %v815 = vunpack.c.h.b16 %v614
    %v816 = vunpack.c.l.b16 %v615
    %v817 = vunpack.c.h.b16 %v615
    %v818 = vunpack.c.l.b16 %v616
    %v819 = vunpack.c.h.b16 %v616
    %v820 = vunpack.c.l.b16 %v617
    %v821 = vunpack.c.h.b16 %v617
    %v822 = vunpack.c.l.b16 %v618
    %v823 = vunpack.c.h.b16 %v618
    %v824 = vunpack.c.l.b16 %v619
    %v825 = vunpack.c.h.b16 %v619
    %v826 = vunpack.c.l.b16 %v620
    %v827 = vunpack.c.h.b16 %v620
    %v828 = vunpack.c.l.b16 %v621
    %v829 = vunpack.c.h.b16 %v621
    %v830 = vunpack.c.l.b16 %v622
    %v831 = vunpack.c.h.b16 %v622
    %v832 = vunpack.c.l.b16 %v623
    %v833 = vunpack.c.h.b16 %v623
    %v834 = vunpack.c.l.b16 %v624
    %v835 = vunpack.c.h.b16 %v624
    %v836 = vunpack.c.l.b16 %v625
    %v837 = vunpack.c.h.b16 %v625
    %v838 = vpack.c.b16 %v712, %v710
    %v839 = vpack.c.b16 %v713, %v711
    %v840 = vpack.c.b16 %v716, %v714
    %v841 = vpack.c.b16 %v717, %v715
    %v842 = vpack.c.b16 %v720, %v718
    %v843 = vpack.c.b16 %v721, %v719
    %v844 = vpack.c.b16 %v724, %v722
    %v845 = vpack.c.b16 %v725, %v723
    %v846 = vpack.c.b16 %v728, %v726
    %v847 = vpack.c.b16 %v729, %v727
    %v848 = vpack.c.b16 %v732, %v730
    %v849 = vpack.c.b16 %v733, %v731
    %v850 = vpack.c.b16 %v736, %v734
    %v851 = vpack.c.b16 %v737, %v735
    %v852 = vpack.c.b16 %v740, %v738
    %v853 = vpack.c.b16 %v741, %v739
    %v854 = vpack.c.b16 %v744, %v742
    %v855 = vpack.c.b16 %v745, %v743
    %v856 = vpack.c.b16 %v748, %v746
    %v857 = vpack.c.b16 %v749, %v747
    %v858 = vpack.c.b16 %v752, %v750
    %v859 = vpack.c.b16 %v753, %v751
    %v860 = vpack.c.b16 %v756, %v754
    %v861 = vpack.c.b16 %v757, %v755
    %v862 = vpack.c.b16 %v760, %v758
    %v863 = vpack.c.b16 %v761, %v759
    %v864 = vpack.c.b16 %v764, %v762
    %v865 = vpack.c.b16 %v765, %v763
    %v866 = vpack.c.b16 %v768, %v766
    %v867 = vpack.c.b16 %v769, %v767
    %v868 = vpack.c.b16 %v772, %v770
    %v869 = vpack.c.b16 %v773, %v771
    %v870 = vpack.c.b16 %v776, %v774
    %v871 = vpack.c.b16 %v777, %v775
    %v872 = vpack.c.b16 %v780, %v778
    %v873 = vpack.c.b16 %v781, %v779
    %v874 = vpack.c.b16 %v784, %v782
    %v875 = vpack.c.b16 %v785, %v783
    %v876 = vpack.c.b16 %v788, %v786
    %v877 = vpack.c.b16 %v789, %v787
    %v878 = vpack.c.b16 %v792, %v790
    %v879 = vpack.c.b16 %v793, %v791
    %v880 = vpack.c.b16 %v796, %v794
    %v881 = vpack.c.b16 %v797, %v795
    %v882 = vpack.c.b16 %v800, %v798
    %v883 = vpack.c.b16 %v801, %v799
    %v884 = vpack.c.b16 %v804, %v802
    %v885 = vpack.c.b16 %v805, %v803
    %v886 = vpack.c.b16 %v808, %v806
    %v887 = vpack.c.b16 %v809, %v807
    %v888 = vpack.c.b16 %v812, %v810
    %v889 = vpack.c.b16 %v813, %v811
    %v890 = vpack.c.b16 %v816, %v814
    %v891 = vpack.c.b16 %v817, %v815
    %v892 = vpack.c.b16 %v820, %v818
    %v893 = vpack.c.b16 %v821, %v819
    %v894 = vpack.c.b16 %v824, %v822
    %v895 = vpack.c.b16 %v825, %v823
    %v896 = vpack.c.b16 %v828, %v826
    %v897 = vpack.c.b16 %v829, %v827
    %v898 = vpack.c.b16 %v832, %v830
    %v899 = vpack.c.b16 %v833, %v831
    %v900 = vpack.c.b16 %v836, %v834
    %v901 = vpack.c.b16 %v837, %v835
    %966 = vmatpush.bf16.msra.mxu0 %v852
    %967 = vmatpush.bf16.msra.mxu0 %v850
    %968 = vmatpush.bf16.msra.mxu0 %v848
    %969 = vmatpush.bf16.msra.mxu0 %v846
    %970 = vmatpush.bf16.msra.mxu0 %v844
    %971 = vmatpush.bf16.msra.mxu0 %v842
    %972 = vmatpush.bf16.msra.mxu0 %v840
    %973 = vmatpush.bf16.msra.mxu0 %v838
    %974 = vmatmul.bf16.gmra.mxu0 %v638
    %v975 = vpop.f32.mrf.mxu0
    %v976 = vadd.f32 %v628, %v975
    %v977 = vpop.f32.mrf.mxu0
    %978 = vdwg.mxu0
    %979 = vmatpush.bf16.msra.mxu0 %v868
    %980 = vmatpush.bf16.msra.mxu0 %v866
    %981 = vmatpush.bf16.msra.mxu0 %v864
    %982 = vmatpush.bf16.msra.mxu0 %v862
    %983 = vmatpush.bf16.msra.mxu0 %v860
    %984 = vmatpush.bf16.msra.mxu0 %v858
    %985 = vmatpush.bf16.msra.mxu0 %v856
    %986 = vmatpush.bf16.msra.mxu0 %v854
    %987 = vmatmul.bf16.gmra.mxu0 %v639
    %v988 = vpop.f32.mrf.mxu0
    %v989 = vadd.f32 %v976, %v988
    %v990 = vpop.f32.mrf.mxu0
    %991 = vdwg.mxu0
    %992 = vmatpush.bf16.msra.mxu0 %v884
    %993 = vmatpush.bf16.msra.mxu0 %v882
    %994 = vmatpush.bf16.msra.mxu0 %v880
    %995 = vmatpush.bf16.msra.mxu0 %v878
    %996 = vmatpush.bf16.msra.mxu0 %v876
    %997 = vmatpush.bf16.msra.mxu0 %v874
    %998 = vmatpush.bf16.msra.mxu0 %v872
    %999 = vmatpush.bf16.msra.mxu0 %v870
    %1000 = vmatmul.bf16.gmra.mxu0 %v640
    %v1001 = vpop.f32.mrf.mxu0
    %v1002 = vadd.f32 %v989, %v1001
    %v1003 = vpop.f32.mrf.mxu0
    %1004 = vdwg.mxu0
    %1005 = vmatpush.bf16.msra.mxu0 %v900
    %1006 = vmatpush.bf16.msra.mxu0 %v898
    %1007 = vmatpush.bf16.msra.mxu0 %v896
    %1008 = vmatpush.bf16.msra.mxu0 %v894
    %1009 = vmatpush.bf16.msra.mxu0 %v892
    %1010 = vmatpush.bf16.msra.mxu0 %v890
    %1011 = vmatpush.bf16.msra.mxu0 %v888
    %1012 = vmatpush.bf16.msra.mxu0 %v886
    %1013 = vmatmul.bf16.gmra.mxu0 %v641
    %v1014 = vpop.f32.mrf.mxu0
    %v1015 = vadd.f32 %v1002, %v1014
    %v1016 = vpop.f32.mrf.mxu0
    %1017 = vdwg.mxu0
    %1018 = vmatpush.bf16.msra.mxu0 %v853
    %1019 = vmatpush.bf16.msra.mxu0 %v851
    %1020 = vmatpush.bf16.msra.mxu0 %v849
    %1021 = vmatpush.bf16.msra.mxu0 %v847
    %1022 = vmatpush.bf16.msra.mxu0 %v845
    %1023 = vmatpush.bf16.msra.mxu0 %v843
    %1024 = vmatpush.bf16.msra.mxu0 %v841
    %1025 = vmatpush.bf16.msra.mxu0 %v839
    %1026 = vmatmul.bf16.gmra.mxu0 %v638
    %v1027 = vpop.f32.mrf.mxu0
    %v1028 = vadd.f32 %v629, %v1027
    %v1029 = vpop.f32.mrf.mxu0
    %1030 = vdwg.mxu0
    %1031 = vmatpush.bf16.msra.mxu0 %v869
    %1032 = vmatpush.bf16.msra.mxu0 %v867
    %1033 = vmatpush.bf16.msra.mxu0 %v865
    %1034 = vmatpush.bf16.msra.mxu0 %v863
    %1035 = vmatpush.bf16.msra.mxu0 %v861
    %1036 = vmatpush.bf16.msra.mxu0 %v859
    %1037 = vmatpush.bf16.msra.mxu0 %v857
    %1038 = vmatpush.bf16.msra.mxu0 %v855
    %1039 = vmatmul.bf16.gmra.mxu0 %v639
    %v1040 = vpop.f32.mrf.mxu0
    %v1041 = vadd.f32 %v1028, %v1040
    %v1042 = vpop.f32.mrf.mxu0
    %1043 = vdwg.mxu0
    %1044 = vmatpush.bf16.msra.mxu0 %v885
    %1045 = vmatpush.bf16.msra.mxu0 %v883
    %1046 = vmatpush.bf16.msra.mxu0 %v881
    %1047 = vmatpush.bf16.msra.mxu0 %v879
    %1048 = vmatpush.bf16.msra.mxu0 %v877
    %1049 = vmatpush.bf16.msra.mxu0 %v875
    %1050 = vmatpush.bf16.msra.mxu0 %v873
    %1051 = vmatpush.bf16.msra.mxu0 %v871
    %1052 = vmatmul.bf16.gmra.mxu0 %v640
    %v1053 = vpop.f32.mrf.mxu0
    %v1054 = vadd.f32 %v1041, %v1053
    %v1055 = vpop.f32.mrf.mxu0
    %1056 = vdwg.mxu0
    %1057 = vmatpush.bf16.msra.mxu0 %v901
    %1058 = vmatpush.bf16.msra.mxu0 %v899
    %1059 = vmatpush.bf16.msra.mxu0 %v897
    %1060 = vmatpush.bf16.msra.mxu0 %v895
    %1061 = vmatpush.bf16.msra.mxu0 %v893
    %1062 = vmatpush.bf16.msra.mxu0 %v891
    %1063 = vmatpush.bf16.msra.mxu0 %v889
    %1064 = vmatpush.bf16.msra.mxu0 %v887
    %1065 = vmatmul.bf16.gmra.mxu0 %v641
    %v1066 = vpop.f32.mrf.mxu0
    %v1067 = vadd.f32 %v1054, %v1066
    %v1068 = vpop.f32.mrf.mxu0
    %1069 = vdwg.mxu0
    %s1070 = sld [smem:[#allocation2]]
    %s1071 = sld [smem:[#allocation2 + $0x1]]
    %v1072 = vstv %s1070
    %v1073 = vmul.f32 %v1072, %v505
    %v1074 = vmul.f32 %v1072, %v557
    %v1075 = vstv %s1071
    %v1076 = vmul.f32 %v1075, %v1015
    %v1077 = vmul.f32 %v1075, %v1067
    %v1078 = vadd.f32 %v1073, %v1076
    %v1079 = vadd.f32 %v1074, %v1077
    %v1080 = vpack.c.bf16 %v1078, %v1078
    %v1081 = vpack.c.bf16 %v1079, %v1079
    %v1082 = vld [vmem:[%s7] sm:$0xf]
    %v1083 = vld [vmem:[%s7 + $0x4] sm:$0xf]
    %v1084 = vld [vmem:[%s7 + $0x8] sm:$0xf]
    %v1085 = vld [vmem:[%s7 + $0xc] sm:$0xf]
    %v1086 = vld [vmem:[%s7 + $0x10] sm:$0xf]
    %v1087 = vld [vmem:[%s7 + $0x14] sm:$0xf]
    %v1088 = vld [vmem:[%s7 + $0x18] sm:$0xf]
    %v1089 = vld [vmem:[%s7 + $0x1c] sm:$0xf]
    %v1090 = vld [vmem:[%s7 + $0x20] sm:$0xf]
    %v1091 = vld [vmem:[%s7 + $0x24] sm:$0xf]
    %v1092 = vld [vmem:[%s7 + $0x28] sm:$0xf]
    %v1093 = vld [vmem:[%s7 + $0x2c] sm:$0xf]
    %v1094 = vld [vmem:[%s7 + $0x30] sm:$0xf]
    %v1095 = vld [vmem:[%s7 + $0x34] sm:$0xf]
    %v1096 = vld [vmem:[%s7 + $0x38] sm:$0xf]
    %v1097 = vld [vmem:[%s7 + $0x3c] sm:$0xf]
    %v1098 = vld [vmem:[%s7 + $0x40] sm:$0xf]
    %v1099 = vld [vmem:[%s7 + $0x44] sm:$0xf]
    %v1100 = vld [vmem:[%s7 + $0x48] sm:$0xf]
    %v1101 = vld [vmem:[%s7 + $0x4c] sm:$0xf]
    %v1102 = vld [vmem:[%s7 + $0x50] sm:$0xf]
    %v1103 = vld [vmem:[%s7 + $0x54] sm:$0xf]
    %v1104 = vld [vmem:[%s7 + $0x58] sm:$0xf]
    %v1105 = vld [vmem:[%s7 + $0x5c] sm:$0xf]
    %v1106 = vld [vmem:[%s7 + $0x60] sm:$0xf]
    %v1107 = vld [vmem:[%s7 + $0x64] sm:$0xf]
    %v1108 = vld [vmem:[%s7 + $0x68] sm:$0xf]
    %v1109 = vld [vmem:[%s7 + $0x6c] sm:$0xf]
    %v1110 = vld [vmem:[%s7 + $0x70] sm:$0xf]
    %v1111 = vld [vmem:[%s7 + $0x74] sm:$0xf]
    %v1112 = vld [vmem:[%s7 + $0x78] sm:$0xf]
    %v1113 = vld [vmem:[%s7 + $0x7c] sm:$0xf]
    %v1114 = vld [vmem:[%s8] sm:$0x1]
    %v1116 = vperm.slane %v1114, 0
    %v1150 = vunpack.c.l.b16 %v1082
    %v1151 = vunpack.c.l.b16 %v1083
    %v1152 = vunpack.c.l.b16 %v1084
    %v1153 = vunpack.c.l.b16 %v1085
    %v1154 = vunpack.c.l.b16 %v1086
    %v1155 = vunpack.c.l.b16 %v1087
    %v1156 = vunpack.c.l.b16 %v1088
    %v1157 = vunpack.c.l.b16 %v1089
    %v1158 = vunpack.c.l.b16 %v1090
    %v1159 = vunpack.c.l.b16 %v1091
    %v1160 = vunpack.c.l.b16 %v1092
    %v1161 = vunpack.c.l.b16 %v1093
    %v1162 = vunpack.c.l.b16 %v1094
    %v1163 = vunpack.c.l.b16 %v1095
    %v1164 = vunpack.c.l.b16 %v1096
    %v1165 = vunpack.c.l.b16 %v1097
    %v1166 = vunpack.c.l.b16 %v1098
    %v1167 = vunpack.c.l.b16 %v1099
    %v1168 = vunpack.c.l.b16 %v1100
    %v1169 = vunpack.c.l.b16 %v1101
    %v1170 = vunpack.c.l.b16 %v1102
    %v1171 = vunpack.c.l.b16 %v1103
    %v1172 = vunpack.c.l.b16 %v1104
    %v1173 = vunpack.c.l.b16 %v1105
    %v1174 = vunpack.c.l.b16 %v1106
    %v1175 = vunpack.c.l.b16 %v1107
    %v1176 = vunpack.c.l.b16 %v1108
    %v1177 = vunpack.c.l.b16 %v1109
    %v1178 = vunpack.c.l.b16 %v1110
    %v1179 = vunpack.c.l.b16 %v1111
    %v1180 = vunpack.c.l.b16 %v1112
    %v1181 = vunpack.c.l.b16 %v1113
    %v1182 = vpack.c.b16 %v1151, %v1150
    %v1183 = vpack.c.b16 %v1153, %v1152
    %v1184 = vpack.c.b16 %v1155, %v1154
    %v1185 = vpack.c.b16 %v1157, %v1156
    %v1186 = vpack.c.b16 %v1159, %v1158
    %v1187 = vpack.c.b16 %v1161, %v1160
    %v1188 = vpack.c.b16 %v1163, %v1162
    %v1189 = vpack.c.b16 %v1165, %v1164
    %v1190 = vpack.c.b16 %v1167, %v1166
    %v1191 = vpack.c.b16 %v1169, %v1168
    %v1192 = vpack.c.b16 %v1171, %v1170
    %v1193 = vpack.c.b16 %v1173, %v1172
    %v1194 = vpack.c.b16 %v1175, %v1174
    %v1195 = vpack.c.b16 %v1177, %v1176
    %v1196 = vpack.c.b16 %v1179, %v1178
    %v1197 = vpack.c.b16 %v1181, %v1180
    %1214 = vmatpush.bf16.msra.mxu0 %v1189
    %1215 = vmatpush.bf16.msra.mxu0 %v1188
    %1216 = vmatpush.bf16.msra.mxu0 %v1187
    %1217 = vmatpush.bf16.msra.mxu0 %v1186
    %1218 = vmatpush.bf16.msra.mxu0 %v1185
    %1219 = vmatpush.bf16.msra.mxu0 %v1184
    %1220 = vmatpush.bf16.msra.mxu0 %v1183
    %1221 = vmatpush.bf16.msra.mxu0 %v1182
    %1222 = vmatmul.bf16.gmra.mxu0 %v1080
    %v1223 = vpop.f32.mrf.mxu0
    %v1224 = vadd.f32 %v1116, %v1223
    %v1225 = vpop.f32.mrf.mxu0
    %1226 = vdwg.mxu0
    %1227 = vmatpush.bf16.msra.mxu0 %v1197
    %1228 = vmatpush.bf16.msra.mxu0 %v1196
    %1229 = vmatpush.bf16.msra.mxu0 %v1195
    %1230 = vmatpush.bf16.msra.mxu0 %v1194
    %1231 = vmatpush.bf16.msra.mxu0 %v1193
    %1232 = vmatpush.bf16.msra.mxu0 %v1192
    %1233 = vmatpush.bf16.msra.mxu0 %v1191
    %1234 = vmatpush.bf16.msra.mxu0 %v1190
    %1235 = vmatmul.bf16.gmra.mxu0 %v1081
    %v1236 = vpop.f32.mrf.mxu0
    %v1237 = vadd.f32 %v1224, %v1236
    %v1238 = vpop.f32.mrf.mxu0
    %1239 = vdwg.mxu0
    %1240 = vst [vmem:[#allocation5] sm:$0xff] %v505
    %1241 = vst [vmem:[#allocation5 + $0x8] sm:$0xff] %v557
    %1242 = vst [vmem:[#allocation6] sm:$0xff] %v1078
    %1243 = vst [vmem:[#allocation6 + $0x8] sm:$0xff] %v1079
    %1244 = vst [vmem:[#allocation8] sm:$0xff] %v1237
    // Predicated region
    $region42: #{feat_classifier_forward.1} parent=1 // pred_check
      _
    $region43: #{feat_classifier_forward.1} parent=1 // pred_check_branch
      %1246 = sbr.rel (0) target = $region45
    $region44: #{feat_classifier_forward.1} parent=1 // pred_region
      %1248 = vsyncadd [#allocation3], 0
      %s1250 = sshll.u32 [#allocation5], 4
      %s1251 = int_to_ptr.vmem [resolvable:$true] %s1250
      %s1252 = sshll.u32 %s9, 4
      %s1253 = int_to_ptr.hbm [resolvable:$true] %s1252
      %1255 = dma.vmem_to_hbm [thread:$0]  %s1251, 256, %s1253, [#allocation3]
    $region45: #{feat_classifier_forward.1} parent=1 // pred_fallthru
      _
    // Predicated region
    $region46: #{feat_classifier_forward.1} parent=1 // pred_check
      _
    $region47: #{feat_classifier_forward.1} parent=1 // pred_check_branch
      %1257 = sbr.rel (0) target = $region49
    $region48: #{feat_classifier_forward.1} parent=1 // pred_region
      %1259 = vsyncadd [#allocation7], 0
      %s1261 = sshll.u32 [#allocation6], 4
      %s1262 = int_to_ptr.vmem [resolvable:$true] %s1261
      %s1263 = sshll.u32 %s10, 4
      %s1264 = int_to_ptr.hbm [resolvable:$true] %s1263
      %1266 = dma.vmem_to_hbm [thread:$0]  %s1262, 256, %s1264, [#allocation7]
    $region49: #{feat_classifier_forward.1} parent=1 // pred_fallthru
      _
    // Predicated region
    $region50: #{feat_classifier_forward.1} parent=1 // pred_check
      _
    $region51: #{feat_classifier_forward.1} parent=1 // pred_check_branch
      %1268 = sbr.rel (0) target = $region53
    $region52: #{feat_classifier_forward.1} parent=1 // pred_region
      %1270 = vsyncadd [#allocation7], 0
      %s1272 = sshll.u32 [#allocation8], 4
      %s1273 = int_to_ptr.vmem [resolvable:$true] %s1272
      %s1274 = sshll.u32 %s11, 4
      %s1275 = int_to_ptr.hbm [resolvable:$true] %s1274
      %1277 = dma.vmem_to_hbm [thread:$0]  %s1273, 128, %s1275, [#allocation7]
    $region53: #{feat_classifier_forward.1} parent=1 // pred_fallthru
      _
    // Predicated region
    $region54: #{feat_classifier_forward.1} parent=1 // pred_check
      _
    $region55: #{feat_classifier_forward.1} parent=1 // pred_check_branch
      %1279 = sbr.rel (0) target = $region57
    $region56: #{feat_classifier_forward.1} parent=1 // pred_region
      %1281 = dma.done [#allocation3], 256
    $region57: #{feat_classifier_forward.1} parent=1 // pred_fallthru
      _
    // Predicated region
    $region58: #{feat_classifier_forward.1} parent=1 // pred_check
      _
    $region59: #{feat_classifier_forward.1} parent=1 // pred_check_branch
      %1283 = sbr.rel (0) target = $region61
    $region60: #{feat_classifier_forward.1} parent=1 // pred_region
      %1285 = dma.done [#allocation7], 256
    $region61: #{feat_classifier_forward.1} parent=1 // pred_fallthru
      _
    // Predicated region
    $region62: #{feat_classifier_forward.1} parent=1 // pred_check
      _
    $region63: #{feat_classifier_forward.1} parent=1 // pred_check_branch
      %1287 = sbr.rel (0) target = $region65
    $region64: #{feat_classifier_forward.1} parent=1 // pred_region
      %1289 = dma.done [#allocation7], 128
    $region65: #{feat_classifier_forward.1} parent=1 // pred_fallthru
      _
    %1290 = vsyncpa [#allocation3], 1
    %1291 = vsyncpa [#allocation7], 1
    %1292 = vsyncpa [#allocation4], 1

</llo_original>
